<compile_context>
chip_gen: v7x
topology: tpu7x:2x2x1
jax: 0.10.0
libtpu: 0.0.40
codegen_flags: <defaults>
</compile_context>

<pallas_src>
import functools

import jax
import jax.numpy as jnp
from jax import lax
from jax.experimental import pallas as pl
from jax.experimental.pallas import tpu as pltpu


def _round_up(x, m):
    return ((x + m - 1) // m) * m


def _select_tiles(B, F_total, itemsize):
    """Pick (block_b, block_f) targeting large, HBM-friendly grid steps."""
    LANE = 128
    sublane = max(8, 32 // itemsize)          # 8 f32, 16 bf16, 32 int8/fp8
    TARGET = 8 * 1024 * 1024                  # combined s+t bytes per grid step
    MIN_SPLIT = 2 * 1024 * 1024               # don't split the batch below this
    MAX_BLOCK_F = 8192
    MAX_BLOCK_B = 1024

    # Feature (lane) axis first: one long contiguous run per row.
    if F_total <= MAX_BLOCK_F:
        block_f = F_total                     # full-dim block (exempt from /128)
    else:
        block_f = MAX_BLOCK_F                 # multiple of 128; tail masked

    bytes_per_row = 2 * block_f * itemsize    # s + t
    bb = max(sublane, TARGET // bytes_per_row)
    bb = min(bb, MAX_BLOCK_B)
    bb = (bb // sublane) * sublane            # sublane-aligned (>= sublane)

    if bb >= B:
        block_b = B                           # single full-dim batch block
        # v7x megacore: split into 2 batch blocks only if each step stays big.
        if B > sublane:
            half = _round_up(pl.cdiv(B, 2), sublane)
            if half < B and half * bytes_per_row >= MIN_SPLIT:
                block_b = half
    else:
        block_b = bb
        nb = pl.cdiv(B, block_b)
        # Keep the number of batch blocks even so 2 TCs (v7x) stay balanced.
        if nb > 1 and nb % 2 == 1:
            cand = _round_up(pl.cdiv(B, nb + 1), sublane)
            if (cand >= sublane and cand < B and pl.cdiv(B, cand) % 2 == 0
                    and cand * bytes_per_row >= MIN_SPLIT):
                block_b = cand
    return block_b, block_f


def _theia_loss_kernel(s_ref, t_ref, out_ref,
                       ss_ref, tt_ref, d2_ref, l1_ref,
                       *, total_b, total_f, block_b, block_f,
                       has_b_tail, has_f_tail, acc_w):
    """Accumulate partial sums over the feature grid axis for one batch block.

    s_ref, t_ref : (block_b, block_f) input tiles (native dtype, cast to f32)
    out_ref      : (1, 3) SMEM partial output for this batch block:
                   [sum(d^2), sum(smooth_l1), sum(1 - cos)]
    scratch refs : (block_b, acc_w) f32 per-row accumulators (ss, tt, d2, l1).
    """
    # All grid queries at top level (program_id inside a pl.when body does not
    # lower on the interpret/CPU path).
    b = pl.program_id(0)
    f = pl.program_id(1)
    nf = pl.num_programs(1)

    @pl.when(f == 0)
    def _init():
        ss_ref[...] = jnp.zeros_like(ss_ref)
        tt_ref[...] = jnp.zeros_like(tt_ref)
        d2_ref[...] = jnp.zeros_like(d2_ref)
        l1_ref[...] = jnp.zeros_like(l1_ref)

    s = s_ref[...].astype(jnp.float32)
    t = t_ref[...].astype(jnp.float32)

    # Ragged-tail masking (no wrapper padding; tail-block contents undefined).
    # Zeroing s/t makes every per-element quantity contribute exactly 0.
    row_ok = None
    if has_f_tail:
        col_ids = f * block_f + lax.broadcasted_iota(jnp.int32, (1, block_f), 1)
        col_ok = col_ids < total_f
        s = jnp.where(col_ok, s, 0.0)
        t = jnp.where(col_ok, t, 0.0)
    if has_b_tail:
        row_ids = b * block_b + lax.broadcasted_iota(jnp.int32, (block_b, 1), 0)
        row_ok = row_ids < total_b
        s = jnp.where(row_ok, s, 0.0)
        t = jnp.where(row_ok, t, 0.0)

    d = s - t
    d2 = d * d
    # SmoothL1 (beta=1): branch on d2 < 1 and use sqrt (EUP) instead of |d| (VPU).
    sl1 = jnp.where(d2 < 1.0, 0.5 * d2, jnp.sqrt(d2) - 0.5)

    def _acc(x):
        if acc_w == 1:
            return jnp.sum(x, axis=1, keepdims=True)
        # Lane-group partial sums only (pure VPU adds across vregs); the
        # 128 -> 1 cross-lane reduce is deferred to the finalize step.
        return x.reshape(x.shape[0], -1, acc_w).sum(axis=1)

    ss_ref[...] += _acc(s * s)
    tt_ref[...] += _acc(t * t)
    d2_ref[...] += _acc(d2)
    l1_ref[...] += _acc(sl1)

    @pl.when(f == nf - 1)
    def _finalize():
        ss = jnp.sum(ss_ref[...], axis=1, keepdims=True)
        tt = jnp.sum(tt_ref[...], axis=1, keepdims=True)
        d2r = jnp.sum(d2_ref[...], axis=1, keepdims=True)
        # <s,t> derived from sums already on hand (no dedicated accumulator).
        st = 0.5 * (ss + tt - d2r)
        # cos = <s,t> / (max(||s||,1e-12) * max(||t||,1e-12)); the secondary
        # 1e-8 clamp of CosineEmbeddingLoss acts on an O(1) value -> no-op.
        inv_norm = (lax.rsqrt(jnp.maximum(ss, 1e-24)) *
                    lax.rsqrt(jnp.maximum(tt, 1e-24)))
        cos_term = 1.0 - st * inv_norm
        if has_b_tail:
            cos_term = jnp.where(row_ok, cos_term, 0.0)
        out_ref[0, 0] = jnp.sum(d2r)
        out_ref[0, 1] = jnp.sum(l1_ref[...])
        out_ref[0, 2] = jnp.sum(cos_term)


def theia_loss_v2(s_feats_patch, t_feats_patch, nimages=None, ncrops=None,
                  block_b=None, block_f=None):
    """Pallas TPU implementation of TheiaLossV2.forward.

    s_feats_patch, t_feats_patch: (B, ...) feature tensors (any float dtype).
    Returns dict of three scalar f32 losses.
    """
    assert s_feats_patch.shape == t_feats_patch.shape
    B = s_feats_patch.shape[0]
    s2 = s_feats_patch.reshape(B, -1)
    t2 = t_feats_patch.reshape(B, -1)
    F_total = s2.shape[1]
    itemsize = s2.dtype.itemsize

    auto_b, auto_f = _select_tiles(B, F_total, itemsize)
    if block_b is None:
        block_b = auto_b
    if block_f is None:
        block_f = auto_f

    nb = pl.cdiv(B, block_b)
    nf = pl.cdiv(F_total, block_f)
    has_b_tail = (B % block_b) != 0
    has_f_tail = (F_total % block_f) != 0
    acc_w = 128 if (block_f % 128 == 0) else 1

    kernel = functools.partial(
        _theia_loss_kernel,
        total_b=B, total_f=F_total, block_b=block_b, block_f=block_f,
        has_b_tail=has_b_tail, has_f_tail=has_f_tail, acc_w=acc_w)

    partials = pl.pallas_call(
        kernel,
        out_shape=jax.ShapeDtypeStruct((nb, 3), jnp.float32),
        grid_spec=pltpu.PrefetchScalarGridSpec(
            num_scalar_prefetch=0,
            grid=(nb, nf),
            in_specs=[
                pl.BlockSpec((block_b, block_f), lambda b, f: (b, f)),
                pl.BlockSpec((block_b, block_f), lambda b, f: (b, f)),
            ],
            out_specs=pl.BlockSpec((1, 3), lambda b, f: (b, 0),
                                   memory_space=pltpu.MemorySpace.SMEM),
            scratch_shapes=[pltpu.VMEM((block_b, acc_w), jnp.float32)] * 4,
        ),
        compiler_params=pltpu.CompilerParams(
            dimension_semantics=("parallel", "arbitrary"),
            vmem_limit_bytes=48 * 1024 * 1024,   # safe on v5e/v6e and v7x (64 MiB)
        ),
    )(s2, t2)

    # Tiny final combine in plain JAX (uses the exact, unpadded element counts).
    n_elems = jnp.float32(B) * jnp.float32(F_total)
    mse_loss = jnp.sum(partials[:, 0]) / n_elems
    l1_loss = jnp.sum(partials[:, 1]) / n_elems
    cos_loss = jnp.sum(partials[:, 2]) / jnp.float32(B)

    return {"mse_loss": mse_loss, "cos_loss": cos_loss, "l1_loss": l1_loss}


def _reference(s, t):
    """Pure-JAX reference mirroring the PyTorch module, for sanity checking."""
    B = s.shape[0]
    s = s.astype(jnp.float32)
    t = t.astype(jnp.float32)
    d = s - t
    mse = jnp.mean(d * d)
    ad = jnp.abs(d)
    l1 = jnp.mean(jnp.where(ad < 1.0, 0.5 * d * d, ad - 0.5))
    s2 = s.reshape(B, -1)
    t2 = t.reshape(B, -1)
    s_n = s2 / jnp.maximum(jnp.linalg.norm(s2, axis=1, keepdims=True), 1e-12)
    t_n = t2 / jnp.maximum(jnp.linalg.norm(t2, axis=1, keepdims=True), 1e-12)
    cos = jnp.sum(s_n * t_n, axis=1) / jnp.maximum(
        jnp.linalg.norm(s_n, axis=1) * jnp.linalg.norm(t_n, axis=1), 1e-8
    )
    cos_loss = jnp.mean(1.0 - cos)
    return {"mse_loss": mse, "cos_loss": cos_loss, "l1_loss": l1}


if __name__ == "__main__":
    key = jax.random.PRNGKey(0)
    k1, k2, k3, k4, k5, k6 = jax.random.split(key, 6)
    ncrops = 2  # module __init__ arg; unused in forward

    # Test 1: small deterministic inputs, single tile (B=2, N=16, D=32), f32.
    B, N, D = 2, 16, 32
    s_feats = jax.random.normal(k1, (B, N, D), dtype=jnp.float32)
    t_feats = jax.random.normal(k2, (B, N, D), dtype=jnp.float32)
    out = theia_loss_v2(s_feats, t_feats, nimages=B, ncrops=ncrops)
    out = jax.tree_util.tree_map(jax.block_until_ready, out)
    ref = _reference(s_feats, t_feats)
    for kk in ("mse_loss", "cos_loss", "l1_loss"):
        assert abs(float(out[kk]) - float(ref[kk])) < 1e-5, (kk, out[kk], ref[kk])

    # Test 2: bf16 inputs, no wrapper upcast, full-dim blocks (B=20, F=2560).
    B2, N2, D2 = 20, 40, 64
    s_feats2 = jax.random.normal(k3, (B2, N2, D2)).astype(jnp.bfloat16)
    t_feats2 = jax.random.normal(k4, (B2, N2, D2)).astype(jnp.bfloat16)
    out2 = theia_loss_v2(s_feats2, t_feats2, nimages=B2, ncrops=ncrops)
    out2 = jax.tree_util.tree_map(jax.block_until_ready, out2)
    ref2 = _reference(s_feats2, t_feats2)
    for kk in ("mse_loss", "cos_loss", "l1_loss"):
        assert abs(float(out2[kk]) - float(ref2[kk])) < 2e-3, (kk, out2[kk], ref2[kk])

    # Test 3: forced small tiles so the (batch, feature) grid AND both ragged
    # tail masks are exercised (B=20 -> 3 blocks of 8 with masked rows;
    # F=500 -> 4 blocks of 128 with a masked column tail).
    B3, N3, D3 = 20, 5, 100
    s_feats3 = jax.random.normal(k5, (B3, N3, D3), dtype=jnp.float32)
    t_feats3 = jax.random.normal(k6, (B3, N3, D3), dtype=jnp.float32)
    out3 = theia_loss_v2(s_feats3, t_feats3, nimages=B3, ncrops=ncrops,
                         block_b=8, block_f=128)
    out3 = jax.tree_util.tree_map(jax.block_until_ready, out3)
    ref3 = _reference(s_feats3, t_feats3)
    for kk in ("mse_loss", "cos_loss", "l1_loss"):
        assert abs(float(out3[kk]) - float(ref3[kk])) < 3e-5, (kk, out3[kk], ref3[kk])

    print("KERNEL_OK")
</pallas_src>

<mosaic_0001>
module attributes {stable_mosaic.version = 11 : i64} {
  func.func @_theia_loss_kernel(%arg0: i32, %arg1: i32, %arg2: memref<2x512xf32, #tpu.memory_space<vmem>>, %arg3: memref<2x512xf32, #tpu.memory_space<vmem>>, %arg4: memref<1x3xf32, #tpu.memory_space<smem>>, %arg5: memref<2x128xf32, #tpu.memory_space<vmem>>, %arg6: memref<2x128xf32, #tpu.memory_space<vmem>>, %arg7: memref<2x128xf32, #tpu.memory_space<vmem>>, %arg8: memref<2x128xf32, #tpu.memory_space<vmem>>) attributes {dimension_semantics = [#tpu.dimension_semantics<parallel>, #tpu.dimension_semantics<arbitrary>], iteration_bounds = array<i64: 1, 1>, scalar_prefetch = 0 : i64, scratch_operands = 4 : i64, tpu.core_type = #tpu.core_type<tc>, window_params = [{transform_indices = @transform_0, window_bounds = array<i64: 2, 512>}, {transform_indices = @transform_1, window_bounds = array<i64: 2, 512>}, {transform_indices = @transform_2, window_bounds = array<i64: 1, 3>}]} {
    %c0_i32 = arith.constant 0 : i32
    %0 = arith.cmpi eq, %arg1, %c0_i32 : i32
    %1 = arith.extui %0 : i1 to i32
    %c0_i32_0 = arith.constant 0 : i32
    %2 = arith.cmpi ne, %1, %c0_i32_0 : i32
    scf.if %2 {
      %cst_28 = arith.constant 0.000000e+00 : f32
      %40 = vector.broadcast %cst_28 : f32 to vector<2x128xf32>
      %c0_29 = arith.constant 0 : index
      %c0_30 = arith.constant 0 : index
      %41 = vector.load %arg5[%c0_29, %c0_30] : memref<2x128xf32, #tpu.memory_space<vmem>>, vector<2x128xf32>
      tpu.vector_store %arg5[%c0_29, %c0_30], %40 {strides = array<i32>} : memref<2x128xf32, #tpu.memory_space<vmem>>, vector<2x128xf32>,
      %cst_31 = arith.constant 0.000000e+00 : f32
      %42 = vector.broadcast %cst_31 : f32 to vector<2x128xf32>
      %c0_32 = arith.constant 0 : index
      %c0_33 = arith.constant 0 : index
      %43 = vector.load %arg6[%c0_32, %c0_33] : memref<2x128xf32, #tpu.memory_space<vmem>>, vector<2x128xf32>
      tpu.vector_store %arg6[%c0_32, %c0_33], %42 {strides = array<i32>} : memref<2x128xf32, #tpu.memory_space<vmem>>, vector<2x128xf32>,
      %cst_34 = arith.constant 0.000000e+00 : f32
      %44 = vector.broadcast %cst_34 : f32 to vector<2x128xf32>
      %c0_35 = arith.constant 0 : index
      %c0_36 = arith.constant 0 : index
      %45 = vector.load %arg7[%c0_35, %c0_36] : memref<2x128xf32, #tpu.memory_space<vmem>>, vector<2x128xf32>
      tpu.vector_store %arg7[%c0_35, %c0_36], %44 {strides = array<i32>} : memref<2x128xf32, #tpu.memory_space<vmem>>, vector<2x128xf32>,
      %cst_37 = arith.constant 0.000000e+00 : f32
      %46 = vector.broadcast %cst_37 : f32 to vector<2x128xf32>
      %c0_38 = arith.constant 0 : index
      %c0_39 = arith.constant 0 : index
      %47 = vector.load %arg8[%c0_38, %c0_39] : memref<2x128xf32, #tpu.memory_space<vmem>>, vector<2x128xf32>
      tpu.vector_store %arg8[%c0_38, %c0_39], %46 {strides = array<i32>} : memref<2x128xf32, #tpu.memory_space<vmem>>, vector<2x128xf32>,
    } else {
    }
    %c0 = arith.constant 0 : index
    %c0_1 = arith.constant 0 : index
    %3 = vector.load %arg2[%c0, %c0_1] : memref<2x512xf32, #tpu.memory_space<vmem>>, vector<2x512xf32>
    %c0_2 = arith.constant 0 : index
    %c0_3 = arith.constant 0 : index
    %4 = vector.load %arg3[%c0_2, %c0_3] : memref<2x512xf32, #tpu.memory_space<vmem>>, vector<2x512xf32>
    %5 = arith.subf %3, %4 : vector<2x512xf32>
    %6 = arith.mulf %5, %5 : vector<2x512xf32>
    %cst = arith.constant 1.000000e+00 : f32
    %7 = vector.broadcast %cst : f32 to vector<2x512xf32>
    %8 = arith.cmpf olt, %6, %7 : vector<2x512xf32>
    %cst_4 = arith.constant 5.000000e-01 : f32
    %9 = vector.broadcast %cst_4 : f32 to vector<2x512xf32>
    %10 = arith.mulf %9, %6 : vector<2x512xf32>
    %11 = math.sqrt %6 : vector<2x512xf32>
    %cst_5 = arith.constant 5.000000e-01 : f32
    %12 = vector.broadcast %cst_5 : f32 to vector<2x512xf32>
    %13 = arith.subf %11, %12 : vector<2x512xf32>
    %14 = arith.select %8, %10, %13 : vector<2x512xi1>, vector<2x512xf32>
    %c0_6 = arith.constant 0 : index
    %c0_7 = arith.constant 0 : index
    %15 = vector.load %arg5[%c0_6, %c0_7] : memref<2x128xf32, #tpu.memory_space<vmem>>, vector<2x128xf32>
    %16 = arith.mulf %3, %3 : vector<2x512xf32>
    %17 = vector.shape_cast %16 : vector<2x512xf32> to vector<2x4x128xf32>
    %cst_8 = arith.constant dense<0.000000e+00> : vector<2x128xf32>
    %18 = vector.multi_reduction <add>, %17, %cst_8 [1] : vector<2x4x128xf32> to vector<2x128xf32>
    %19 = arith.addf %15, %18 : vector<2x128xf32>
    %c0_9 = arith.constant 0 : index
    %c0_10 = arith.constant 0 : index
    %20 = vector.load %arg5[%c0_9, %c0_10] : memref<2x128xf32, #tpu.memory_space<vmem>>, vector<2x128xf32>
    tpu.vector_store %arg5[%c0_9, %c0_10], %19 {strides = array<i32>} : memref<2x128xf32, #tpu.memory_space<vmem>>, vector<2x128xf32>,
    %c0_11 = arith.constant 0 : index
    %c0_12 = arith.constant 0 : index
    %21 = vector.load %arg6[%c0_11, %c0_12] : memref<2x128xf32, #tpu.memory_space<vmem>>, vector<2x128xf32>
    %22 = arith.mulf %4, %4 : vector<2x512xf32>
    %23 = vector.shape_cast %22 : vector<2x512xf32> to vector<2x4x128xf32>
    %cst_13 = arith.constant dense<0.000000e+00> : vector<2x128xf32>
    %24 = vector.multi_reduction <add>, %23, %cst_13 [1] : vector<2x4x128xf32> to vector<2x128xf32>
    %25 = arith.addf %21, %24 : vector<2x128xf32>
    %c0_14 = arith.constant 0 : index
    %c0_15 = arith.constant 0 : index
    %26 = vector.load %arg6[%c0_14, %c0_15] : memref<2x128xf32, #tpu.memory_space<vmem>>, vector<2x128xf32>
    tpu.vector_store %arg6[%c0_14, %c0_15], %25 {strides = array<i32>} : memref<2x128xf32, #tpu.memory_space<vmem>>, vector<2x128xf32>,
    %c0_16 = arith.constant 0 : index
    %c0_17 = arith.constant 0 : index
    %27 = vector.load %arg7[%c0_16, %c0_17] : memref<2x128xf32, #tpu.memory_space<vmem>>, vector<2x128xf32>
    %28 = vector.shape_cast %6 : vector<2x512xf32> to vector<2x4x128xf32>
    %cst_18 = arith.constant dense<0.000000e+00> : vector<2x128xf32>
    %29 = vector.multi_reduction <add>, %28, %cst_18 [1] : vector<2x4x128xf32> to vector<2x128xf32>
    %30 = arith.addf %27, %29 : vector<2x128xf32>
    %c0_19 = arith.constant 0 : index
    %c0_20 = arith.constant 0 : index
    %31 = vector.load %arg7[%c0_19, %c0_20] : memref<2x128xf32, #tpu.memory_space<vmem>>, vector<2x128xf32>
    tpu.vector_store %arg7[%c0_19, %c0_20], %30 {strides = array<i32>} : memref<2x128xf32, #tpu.memory_space<vmem>>, vector<2x128xf32>,
    %c0_21 = arith.constant 0 : index
    %c0_22 = arith.constant 0 : index
    %32 = vector.load %arg8[%c0_21, %c0_22] : memref<2x128xf32, #tpu.memory_space<vmem>>, vector<2x128xf32>
    %33 = vector.shape_cast %14 : vector<2x512xf32> to vector<2x4x128xf32>
    %cst_23 = arith.constant dense<0.000000e+00> : vector<2x128xf32>
    %34 = vector.multi_reduction <add>, %33, %cst_23 [1] : vector<2x4x128xf32> to vector<2x128xf32>
    %35 = arith.addf %32, %34 : vector<2x128xf32>
    %c0_24 = arith.constant 0 : index
    %c0_25 = arith.constant 0 : index
    %36 = vector.load %arg8[%c0_24, %c0_25] : memref<2x128xf32, #tpu.memory_space<vmem>>, vector<2x128xf32>
    tpu.vector_store %arg8[%c0_24, %c0_25], %35 {strides = array<i32>} : memref<2x128xf32, #tpu.memory_space<vmem>>, vector<2x128xf32>,
    %c0_i32_26 = arith.constant 0 : i32
    %37 = arith.cmpi eq, %arg1, %c0_i32_26 : i32
    %38 = arith.extui %37 : i1 to i32
    %c0_i32_27 = arith.constant 0 : i32
    %39 = arith.cmpi ne, %38, %c0_i32_27 : i32
    scf.if %39 {
      %c0_28 = arith.constant 0 : index
      %c0_29 = arith.constant 0 : index
      %40 = vector.load %arg5[%c0_28, %c0_29] : memref<2x128xf32, #tpu.memory_space<vmem>>, vector<2x128xf32>
      %cst_30 = arith.constant dense<0.000000e+00> : vector<2xf32>
      %41 = vector.multi_reduction <add>, %40, %cst_30 [1] : vector<2x128xf32> to vector<2xf32>
      %42 = vector.shape_cast %41 : vector<2xf32> to vector<2x1xf32>
      %c0_31 = arith.constant 0 : index
      %c0_32 = arith.constant 0 : index
      %43 = vector.load %arg6[%c0_31, %c0_32] : memref<2x128xf32, #tpu.memory_space<vmem>>, vector<2x128xf32>
      %cst_33 = arith.constant dense<0.000000e+00> : vector<2xf32>
      %44 = vector.multi_reduction <add>, %43, %cst_33 [1] : vector<2x128xf32> to vector<2xf32>
      %45 = vector.shape_cast %44 : vector<2xf32> to vector<2x1xf32>
      %c0_34 = arith.constant 0 : index
      %c0_35 = arith.constant 0 : index
      %46 = vector.load %arg7[%c0_34, %c0_35] : memref<2x128xf32, #tpu.memory_space<vmem>>, vector<2x128xf32>
      %cst_36 = arith.constant dense<0.000000e+00> : vector<2xf32>
      %47 = vector.multi_reduction <add>, %46, %cst_36 [1] : vector<2x128xf32> to vector<2xf32>
      %48 = vector.shape_cast %47 : vector<2xf32> to vector<2x1xf32>
      %49 = arith.addf %42, %45 : vector<2x1xf32>
      %50 = arith.subf %49, %48 : vector<2x1xf32>
      %cst_37 = arith.constant 5.000000e-01 : f32
      %51 = vector.broadcast %cst_37 : f32 to vector<2x1xf32>
      %52 = arith.mulf %51, %50 : vector<2x1xf32>
      %cst_38 = arith.constant 1.000000e-24 : f32
      %53 = vector.broadcast %cst_38 : f32 to vector<2x1xf32>
      %54 = arith.maximumf %42, %53 : vector<2x1xf32>
      %55 = math.rsqrt %54 : vector<2x1xf32>
      %cst_39 = arith.constant 1.000000e-24 : f32
      %56 = vector.broadcast %cst_39 : f32 to vector<2x1xf32>
      %57 = arith.maximumf %45, %56 : vector<2x1xf32>
      %58 = math.rsqrt %57 : vector<2x1xf32>
      %59 = arith.mulf %55, %58 : vector<2x1xf32>
      %60 = arith.mulf %52, %59 : vector<2x1xf32>
      %cst_40 = arith.constant 1.000000e+00 : f32
      %61 = vector.broadcast %cst_40 : f32 to vector<2x1xf32>
      %62 = arith.subf %61, %60 : vector<2x1xf32>
      %63 = vector.shape_cast %48 : vector<2x1xf32> to vector<1x2x1xf32>
      %cst_41 = arith.constant dense<0.000000e+00> : vector<1xf32>
      %64 = vector.multi_reduction <add>, %63, %cst_41 [1, 2] : vector<1x2x1xf32> to vector<1xf32>
      %65 = vector.shape_cast %64 : vector<1xf32> to vector<1x1x1xf32>
      %66 = vector.extract %65[0, 0, 0] : f32 from vector<1x1x1xf32>
      %c0_42 = arith.constant 0 : index
      %c0_43 = arith.constant 0 : index
      %67 = memref.load %arg4[%c0_42, %c0_43] : memref<1x3xf32, #tpu.memory_space<smem>>
      memref.store %66, %arg4[%c0_42, %c0_43] : memref<1x3xf32, #tpu.memory_space<smem>>
      %c0_44 = arith.constant 0 : index
      %c0_45 = arith.constant 0 : index
      %68 = vector.load %arg8[%c0_44, %c0_45] : memref<2x128xf32, #tpu.memory_space<vmem>>, vector<2x128xf32>
      %69 = vector.shape_cast %68 : vector<2x128xf32> to vector<1x2x128xf32>
      %cst_46 = arith.constant dense<0.000000e+00> : vector<1xf32>
      %70 = vector.multi_reduction <add>, %69, %cst_46 [1, 2] : vector<1x2x128xf32> to vector<1xf32>
      %71 = vector.shape_cast %70 : vector<1xf32> to vector<1x1x1xf32>
      %72 = vector.extract %71[0, 0, 0] : f32 from vector<1x1x1xf32>
      %c0_47 = arith.constant 0 : index
      %c1 = arith.constant 1 : index
      %73 = memref.load %arg4[%c0_47, %c1] : memref<1x3xf32, #tpu.memory_space<smem>>
      memref.store %72, %arg4[%c0_47, %c1] : memref<1x3xf32, #tpu.memory_space<smem>>
      %74 = vector.shape_cast %62 : vector<2x1xf32> to vector<1x2x1xf32>
      %cst_48 = arith.constant dense<0.000000e+00> : vector<1xf32>
      %75 = vector.multi_reduction <add>, %74, %cst_48 [1, 2] : vector<1x2x1xf32> to vector<1xf32>
      %76 = vector.shape_cast %75 : vector<1xf32> to vector<1x1x1xf32>
      %77 = vector.extract %76[0, 0, 0] : f32 from vector<1x1x1xf32>
      %c0_49 = arith.constant 0 : index
      %c2 = arith.constant 2 : index
      %78 = memref.load %arg4[%c0_49, %c2] : memref<1x3xf32, #tpu.memory_space<smem>>
      memref.store %77, %arg4[%c0_49, %c2] : memref<1x3xf32, #tpu.memory_space<smem>>
    } else {
    }
    return
  }
  func.func @transform_0(%arg0: i32, %arg1: i32) -> (i32, i32) {
    %c0_i32 = arith.constant 0 : i32
    return %arg0, %arg1 : i32, i32
  }
  func.func @transform_1(%arg0: i32, %arg1: i32) -> (i32, i32) {
    %c0_i32 = arith.constant 0 : i32
    return %arg0, %arg1 : i32, i32
  }
  func.func @transform_2(%arg0: i32, %arg1: i32) -> (i32, i32) {
    %c0_i32 = arith.constant 0 : i32
    %c0_i32_0 = arith.constant 0 : i32
    return %arg0, %c0_i32 : i32, i32
  }
}

</mosaic_0001>

<llo_original>
// kernel: tpu_custom_call.1
$region0: #{tpu_custom_call.1}
  #allocation0 [shape = 'u32[]', space=smem, size = 0x4, offset = 0x4, fixed_abs, tag = 'smem constant byte address 0x4 - core index']
  #allocation1 [shape = 'u32[144,128]{1,0:T(1,128)}', space=vmem, size = 0x12000, scoped, tag = 'internal scratch']
  #allocation2 [shape = 'f32[2,128]{1,0:T(2,128)}', space=vmem, size = 0x400, scoped, tag = 'scratch operand']
  #allocation3 [shape = 'f32[2,128]{1,0:T(2,128)}', space=vmem, size = 0x400, scoped, tag = 'scratch operand']
  #allocation4 [shape = 'f32[2,128]{1,0:T(2,128)}', space=vmem, size = 0x400, scoped, tag = 'scratch operand']
  #allocation5 [shape = 'f32[2,128]{1,0:T(2,128)}', space=vmem, size = 0x400, scoped, tag = 'scratch operand']
  %s0 = inlined_call_operand.hbm [shape: f32[2,512], index: 0, kind: input, shape index: {}]
  %s1 = inlined_call_operand.hbm [shape: f32[2,512], index: 1, kind: input, shape index: {}]
  %s2 = inlined_call_operand.hbm [shape: f32[1,3], index: 2, kind: output, shape index: {}]
  %s3 = sld [smem:[#allocation0]]
  $region34: #{tpu_custom_call.1} parent=0
    _
  %s5 = ssub.s32 1, %s3
  %s6 = scalar_select 0, %s5, %s3
  $region1: #{tpu_custom_call.1} parent=0
    #allocation6 [shape = 'u8[4096]{0}', space=vmem, size = 0x1000, scoped, tag = 'input window, operand 0, single buffered']
    #allocation7 [shape = 's32[1]{0}', space=sflag, size = 0x4, scoped, tag = 'scoped memory for tpu_custom_call.1']
    #allocation8 [shape = 's32[1]{0}', space=sflag, size = 0x4, scoped, tag = 'scoped memory for tpu_custom_call.1']
    #allocation9 [shape = 'u8[4096]{0}', space=vmem, size = 0x1000, scoped, tag = 'input window, operand 1, single buffered']
    #allocation10 [shape = 's32[1]{0}', space=sflag, size = 0x4, scoped, tag = 'scoped memory for tpu_custom_call.1']
    #allocation11 [shape = 'u8[512]{0}', space=smem, size = 0x200, scoped, tag = 'output window, operand 0, single buffered']
    %7 = vsyncpa [#allocation7], 0
    %8 = vsyncpa [#allocation10], 0
    %9 = vsyncpa [#allocation8], 0
    // Predicated region
    $region2: #{tpu_custom_call.1} parent=1 // pred_check
      _
    $region3: #{tpu_custom_call.1} parent=1 // pred_check_branch
      %11 = sbr.rel (0) target = $region5
    $region4: #{tpu_custom_call.1} parent=1 // pred_region
      %s13 = ssub.s32 128, 128
      %14 = vsyncadd [#allocation7], %s13
      %s16 = sshll.u32 [#allocation6], 4
      %s17 = int_to_ptr.vmem [resolvable:$true] %s16
      %19 = dma.hbm_to_vmem [thread:$0]  %s0, 128, %s17, [#allocation7]
    $region5: #{tpu_custom_call.1} parent=1 // pred_fallthru
      _
    // Predicated region
    $region6: #{tpu_custom_call.1} parent=1 // pred_check
      _
    $region7: #{tpu_custom_call.1} parent=1 // pred_check_branch
      %21 = sbr.rel (0) target = $region9
    $region8: #{tpu_custom_call.1} parent=1 // pred_region
      %s23 = ssub.s32 128, 128
      %24 = vsyncadd [#allocation10], %s23
      %s26 = sshll.u32 [#allocation9], 4
      %s27 = int_to_ptr.vmem [resolvable:$true] %s26
      %29 = dma.hbm_to_vmem [thread:$0]  %s1, 128, %s27, [#allocation10]
    $region9: #{tpu_custom_call.1} parent=1 // pred_fallthru
      _
    // Predicated region
    $region10: #{tpu_custom_call.1} parent=1 // pred_check
      _
    $region11: #{tpu_custom_call.1} parent=1 // pred_check_branch
      %31 = sbr.rel (0) target = $region13
    $region12: #{tpu_custom_call.1} parent=1 // pred_region
      %32 = dma.done [#allocation7], 128
    $region13: #{tpu_custom_call.1} parent=1 // pred_fallthru
      _
    // Predicated region
    $region14: #{tpu_custom_call.1} parent=1 // pred_check
      _
    $region15: #{tpu_custom_call.1} parent=1 // pred_check_branch
      %34 = sbr.rel (0) target = $region17
    $region16: #{tpu_custom_call.1} parent=1 // pred_region
      %35 = dma.done [#allocation10], 128
    $region17: #{tpu_custom_call.1} parent=1 // pred_fallthru
      _
    %p36 = scmp.eq.s32.totalorder 0, 0
    // Predicated region
    $region18: #{tpu_custom_call.1} parent=1 // pred_check
      %p37 = pneg %p36
    $region19: #{tpu_custom_call.1} parent=1 // pred_check_branch
      %39 = sbr.rel (%p37) target = $region21
    $region20: #{tpu_custom_call.1} parent=1 // pred_region
      %40 = vst [vmem:[#allocation2] sm:$0x3] 0.0
      %41 = vst [vmem:[#allocation3] sm:$0x3] 0.0
      %42 = vst [vmem:[#allocation4] sm:$0x3] 0.0
      %43 = vst [vmem:[#allocation5] sm:$0x3] 0.0
    $region21: #{tpu_custom_call.1} parent=1 // pred_fallthru
      _
    %v44 = vld [vmem:[#allocation6] sm:$0xff]
    %v45 = vld [vmem:[#allocation9] sm:$0xff]
    %v46 = vsub.f32 %v44, %v45
    %v47 = vmul.f32 %v46, %v46
    %vm48 = vcmp.lt.f32.partialorder %v47, 1.0
    %v49 = vmul.f32 %v47, 0.5
    %v50 = vrsqrt.pop %v47
    %v51 = vmul.f32 %v47, %v50
    %vm52 = vcmp.eq.f32.partialorder %v47, inf
    %v53 = vsel %vm52, %v47, %v51
    %vm54 = vcmp.eq.f32.partialorder %v47, 0.0
    %v55 = vand.u32 %v47, 2147483648
    %v56 = vsel %vm54, %v55, %v53
    %v57 = vsub.f32 %v56, 0.5
    %v58 = vsel %vm48, %v49, %v57
    %v59 = vld [vmem:[#allocation2] sm:$0x3]
    %v60 = vmul.f32 %v44, %v44
    %v62 = vrot.slane %v60, 2
    %v64 = vrot.slane %v60, 4
    %v66 = vrot.slane %v60, 6
    %v68 = vcombine.low %v60, %v62
    %v70 = vunpack.c.l.s4 1934713408
    %v71 = vunpack.c.0.s8 %v70
    %v72 = vlaneseq
    %v73 = vshrl.u32 %v72, 7
    %v74 = vsub.s32 %v71, %v73
    %v75 = vrot.slane %v68, %v74
    %v76 = vcombine.high %v75, 0.0
    %v77 = vcombine.low %v64, %v66
    %v79 = vunpack.c.l.s4 1934713408
    %v80 = vunpack.c.0.s8 %v79
    %v81 = vlaneseq
    %v82 = vshrl.u32 %v81, 7
    %v83 = vsub.s32 %v80, %v82
    %v84 = vrot.slane %v77, %v83
    %v85 = vcombine.high %v84, 0.0
    %v90 = vcombine.low %v75, %v84
    %v92 = vunpack.c.l.s4 1983009808
    %v93 = vunpack.c.0.s8 %v92
    %v94 = vlaneseq
    %v95 = vshrl.u32 %v94, 7
    %v96 = vsub.s32 %v93, %v95
    %v97 = vrot.slane %v90, %v96
    %v98 = vcombine.low %v76, %v85
    %v100 = vunpack.c.l.s4 1983009808
    %v101 = vunpack.c.0.s8 %v100
    %v102 = vlaneseq
    %v103 = vshrl.u32 %v102, 7
    %v104 = vsub.s32 %v101, %v103
    %v105 = vrot.slane %v98, %v104
    %vm108 = vcmask 1043456
    %v109 = vsel %vm108, %v97, 0.0
    %v110 = vrot.slane %v109, 4
    %v111 = vadd.f32 %v109, %v110
    %v112 = vrot.slane %v111, 2
    %v113 = vadd.f32 %v111, %v112
    %v114 = vrot.slane %v113, 1
    %v115 = vadd.f32 %v113, %v114
    %v116 = vsel %vm108, %v105, 0.0
    %v117 = vrot.slane %v116, 4
    %v118 = vadd.f32 %v116, %v117
    %v119 = vrot.slane %v118, 2
    %v120 = vadd.f32 %v118, %v119
    %v121 = vrot.slane %v120, 1
    %v122 = vadd.f32 %v120, %v121
    %vm125 = vcmask 1041409
    %v126 = vsel %vm125, %v122, %v115
    %v128 = vadd.f32 %v59, %v126
    %129 = vst [vmem:[#allocation2] sm:$0x3] %v128
    %v130 = vld [vmem:[#allocation3] sm:$0x3]
    %v131 = vmul.f32 %v45, %v45
    %v133 = vrot.slane %v131, 2
    %v135 = vrot.slane %v131, 4
    %v137 = vrot.slane %v131, 6
    %v139 = vcombine.low %v131, %v133
    %v141 = vunpack.c.l.s4 1934713408
    %v142 = vunpack.c.0.s8 %v141
    %v143 = vlaneseq
    %v144 = vshrl.u32 %v143, 7
    %v145 = vsub.s32 %v142, %v144
    %v146 = vrot.slane %v139, %v145
    %v147 = vcombine.high %v146, 0.0
    %v148 = vcombine.low %v135, %v137
    %v150 = vunpack.c.l.s4 1934713408
    %v151 = vunpack.c.0.s8 %v150
    %v152 = vlaneseq
    %v153 = vshrl.u32 %v152, 7
    %v154 = vsub.s32 %v151, %v153
    %v155 = vrot.slane %v148, %v154
    %v156 = vcombine.high %v155, 0.0
    %v161 = vcombine.low %v146, %v155
    %v163 = vunpack.c.l.s4 1983009808
    %v164 = vunpack.c.0.s8 %v163
    %v165 = vlaneseq
    %v166 = vshrl.u32 %v165, 7
    %v167 = vsub.s32 %v164, %v166
    %v168 = vrot.slane %v161, %v167
    %v169 = vcombine.low %v147, %v156
    %v171 = vunpack.c.l.s4 1983009808
    %v172 = vunpack.c.0.s8 %v171
    %v173 = vlaneseq
    %v174 = vshrl.u32 %v173, 7
    %v175 = vsub.s32 %v172, %v174
    %v176 = vrot.slane %v169, %v175
    %v179 = vsel %vm108, %v168, 0.0
    %v180 = vrot.slane %v179, 4
    %v181 = vadd.f32 %v179, %v180
    %v182 = vrot.slane %v181, 2
    %v183 = vadd.f32 %v181, %v182
    %v184 = vrot.slane %v183, 1
    %v185 = vadd.f32 %v183, %v184
    %v186 = vsel %vm108, %v176, 0.0
    %v187 = vrot.slane %v186, 4
    %v188 = vadd.f32 %v186, %v187
    %v189 = vrot.slane %v188, 2
    %v190 = vadd.f32 %v188, %v189
    %v191 = vrot.slane %v190, 1
    %v192 = vadd.f32 %v190, %v191
    %v195 = vsel %vm125, %v192, %v185
    %v197 = vadd.f32 %v130, %v195
    %198 = vst [vmem:[#allocation3] sm:$0x3] %v197
    %v199 = vld [vmem:[#allocation4] sm:$0x3]
    %v201 = vrot.slane %v47, 2
    %v203 = vrot.slane %v47, 4
    %v205 = vrot.slane %v47, 6
    %v207 = vcombine.low %v47, %v201
    %v209 = vunpack.c.l.s4 1934713408
    %v210 = vunpack.c.0.s8 %v209
    %v211 = vlaneseq
    %v212 = vshrl.u32 %v211, 7
    %v213 = vsub.s32 %v210, %v212
    %v214 = vrot.slane %v207, %v213
    %v215 = vcombine.high %v214, 0.0
    %v216 = vcombine.low %v203, %v205
    %v218 = vunpack.c.l.s4 1934713408
    %v219 = vunpack.c.0.s8 %v218
    %v220 = vlaneseq
    %v221 = vshrl.u32 %v220, 7
    %v222 = vsub.s32 %v219, %v221
    %v223 = vrot.slane %v216, %v222
    %v224 = vcombine.high %v223, 0.0
    %v229 = vcombine.low %v214, %v223
    %v231 = vunpack.c.l.s4 1983009808
    %v232 = vunpack.c.0.s8 %v231
    %v233 = vlaneseq
    %v234 = vshrl.u32 %v233, 7
    %v235 = vsub.s32 %v232, %v234
    %v236 = vrot.slane %v229, %v235
    %v237 = vcombine.low %v215, %v224
    %v239 = vunpack.c.l.s4 1983009808
    %v240 = vunpack.c.0.s8 %v239
    %v241 = vlaneseq
    %v242 = vshrl.u32 %v241, 7
    %v243 = vsub.s32 %v240, %v242
    %v244 = vrot.slane %v237, %v243
    %v247 = vsel %vm108, %v236, 0.0
    %v248 = vrot.slane %v247, 4
    %v249 = vadd.f32 %v247, %v248
    %v250 = vrot.slane %v249, 2
    %v251 = vadd.f32 %v249, %v250
    %v252 = vrot.slane %v251, 1
    %v253 = vadd.f32 %v251, %v252
    %v254 = vsel %vm108, %v244, 0.0
    %v255 = vrot.slane %v254, 4
    %v256 = vadd.f32 %v254, %v255
    %v257 = vrot.slane %v256, 2
    %v258 = vadd.f32 %v256, %v257
    %v259 = vrot.slane %v258, 1
    %v260 = vadd.f32 %v258, %v259
    %v263 = vsel %vm125, %v260, %v253
    %v265 = vadd.f32 %v199, %v263
    %266 = vst [vmem:[#allocation4] sm:$0x3] %v265
    %v267 = vld [vmem:[#allocation5] sm:$0x3]
    %v269 = vrot.slane %v58, 2
    %v271 = vrot.slane %v58, 4
    %v273 = vrot.slane %v58, 6
    %v275 = vcombine.low %v58, %v269
    %v277 = vunpack.c.l.s4 1934713408
    %v278 = vunpack.c.0.s8 %v277
    %v279 = vlaneseq
    %v280 = vshrl.u32 %v279, 7
    %v281 = vsub.s32 %v278, %v280
    %v282 = vrot.slane %v275, %v281
    %v283 = vcombine.high %v282, 0.0
    %v284 = vcombine.low %v271, %v273
    %v286 = vunpack.c.l.s4 1934713408
    %v287 = vunpack.c.0.s8 %v286
    %v288 = vlaneseq
    %v289 = vshrl.u32 %v288, 7
    %v290 = vsub.s32 %v287, %v289
    %v291 = vrot.slane %v284, %v290
    %v292 = vcombine.high %v291, 0.0
    %v297 = vcombine.low %v282, %v291
    %v299 = vunpack.c.l.s4 1983009808
    %v300 = vunpack.c.0.s8 %v299
    %v301 = vlaneseq
    %v302 = vshrl.u32 %v301, 7
    %v303 = vsub.s32 %v300, %v302
    %v304 = vrot.slane %v297, %v303
    %v305 = vcombine.low %v283, %v292
    %v307 = vunpack.c.l.s4 1983009808
    %v308 = vunpack.c.0.s8 %v307
    %v309 = vlaneseq
    %v310 = vshrl.u32 %v309, 7
    %v311 = vsub.s32 %v308, %v310
    %v312 = vrot.slane %v305, %v311
    %v315 = vsel %vm108, %v304, 0.0
    %v316 = vrot.slane %v315, 4
    %v317 = vadd.f32 %v315, %v316
    %v318 = vrot.slane %v317, 2
    %v319 = vadd.f32 %v317, %v318
    %v320 = vrot.slane %v319, 1
    %v321 = vadd.f32 %v319, %v320
    %v322 = vsel %vm108, %v312, 0.0
    %v323 = vrot.slane %v322, 4
    %v324 = vadd.f32 %v322, %v323
    %v325 = vrot.slane %v324, 2
    %v326 = vadd.f32 %v324, %v325
    %v327 = vrot.slane %v326, 1
    %v328 = vadd.f32 %v326, %v327
    %v331 = vsel %vm125, %v328, %v321
    %v333 = vadd.f32 %v267, %v331
    %334 = vst [vmem:[#allocation5] sm:$0x3] %v333
    // Predicated region
    $region22: #{tpu_custom_call.1} parent=1 // pred_check
      %p335 = pneg %p36
    $region23: #{tpu_custom_call.1} parent=1 // pred_check_branch
      %337 = sbr.rel (%p335) target = $region25
    $region24: #{tpu_custom_call.1} parent=1 // pred_region
      %v338 = vld [vmem:[#allocation2] sm:$0x3]
      %vm339 = vcmask 1041408
      %v340 = vsel %vm339, %v338, 0.0
      %341 = vadd.xlane.f32.xlu0 %v340
      %v342 = vpop.xlane.xlu0 %341
      %v343 = vld [vmem:[#allocation3] sm:$0x3]
      %v344 = vsel %vm339, %v343, 0.0
      %345 = vadd.xlane.f32.xlu0 %v344
      %v346 = vpop.xlane.xlu0 %345
      %v347 = vld [vmem:[#allocation4] sm:$0x3]
      %v348 = vsel %vm339, %v347, 0.0
      %349 = vadd.xlane.f32.xlu0 %v348
      %v350 = vpop.xlane.xlu0 %349
      %v351 = vadd.f32 %v342, %v346
      %v352 = vsub.f32 %v351, %v350
      %v353 = vmul.f32 %v352, 0.5
      %v354 = vmax.f32 %v342, 1e-24
      %v355 = vrsqrt.pop %v354
      %v356 = vmax.f32 %v346, 1e-24
      %v357 = vrsqrt.pop %v356
      %v358 = vmul.f32 %v355, %v357
      %v359 = vmul.f32 %v353, %v358
      %v360 = vsub.f32 1.0, %v359
      %vm361 = vcmask 1024
      %v362 = vsel %vm361, %v350, 0.0
      %363 = vadd.xlane.f32.xlu0 %v362
      %v364 = vpop.xlane.xlu0 %363
      %v365 = vrot.slane %v364, 4
      %v366 = vadd.f32 %v364, %v365
      %v367 = vrot.slane %v366, 2
      %v368 = vadd.f32 %v366, %v367
      %v369 = vrot.slane %v368, 1
      %v370 = vadd.f32 %v368, %v369
      %s371 = vtos %v370
      %s372 = scalar_lea.smem [#allocation11], 0
      %373 = sst [smem:[%s372]] %s371
      %v374 = vld [vmem:[#allocation5] sm:$0x3]
      %v375 = vsel %vm339, %v374, 0.0
      %376 = vadd.xlane.f32.xlu0 %v375
      %v377 = vpop.xlane.xlu0 %376
      %v378 = vrot.slane %v377, 4
      %v379 = vadd.f32 %v377, %v378
      %v380 = vrot.slane %v379, 2
      %v381 = vadd.f32 %v379, %v380
      %v382 = vrot.slane %v381, 1
      %v383 = vadd.f32 %v381, %v382
      %s384 = vtos %v383
      %s385 = scalar_lea.smem [#allocation11], 1
      %386 = sst [smem:[%s385]] %s384
      %v387 = vsel %vm361, %v360, 0.0
      %388 = vadd.xlane.f32.xlu0 %v387
      %v389 = vpop.xlane.xlu0 %388
      %v390 = vrot.slane %v389, 4
      %v391 = vadd.f32 %v389, %v390
      %v392 = vrot.slane %v391, 2
      %v393 = vadd.f32 %v391, %v392
      %v394 = vrot.slane %v393, 1
      %v395 = vadd.f32 %v393, %v394
      %s396 = vtos %v395
      %s397 = scalar_lea.smem [#allocation11], 2
      %398 = sst [smem:[%s397]] %s396
    $region25: #{tpu_custom_call.1} parent=1 // pred_fallthru
      _
    // Predicated region
    $region26: #{tpu_custom_call.1} parent=1 // pred_check
      _
    $region27: #{tpu_custom_call.1} parent=1 // pred_check_branch
      %400 = sbr.rel (0) target = $region29
    $region28: #{tpu_custom_call.1} parent=1 // pred_region
      %s402 = ssub.s32 16, 16
      %403 = vsyncadd [#allocation8], %s402
      %406 = dma.smem_to_hbm [#allocation11], 16, %s2, [#allocation8]
    $region29: #{tpu_custom_call.1} parent=1 // pred_fallthru
      _
    // Predicated region
    $region30: #{tpu_custom_call.1} parent=1 // pred_check
      _
    $region31: #{tpu_custom_call.1} parent=1 // pred_check_branch
      %408 = sbr.rel (0) target = $region33
    $region32: #{tpu_custom_call.1} parent=1 // pred_region
      %409 = dma.done [#allocation8], 16
    $region33: #{tpu_custom_call.1} parent=1 // pred_fallthru
      _
    %410 = sfence
    %411 = vsyncpa [#allocation7], 1
    %412 = vsyncpa [#allocation10], 1
    %413 = vsyncpa [#allocation8], 1

</llo_original>
